<compile_context>
chip_gen: v7x
topology: tpu7x:2x2x1
jax: 0.10.0
libtpu: 0.0.40
codegen_flags: <defaults>
</compile_context>

<pallas_src>
import functools

import jax
import jax.numpy as jnp
from jax.experimental import pallas as pl
from jax.experimental.pallas import tpu as pltpu

_LANES = 128


def _round_up(x, m):
    return ((x + m - 1) // m) * m


def mlp_kernel(x_ref, w1_ref, b1_ref, w2_ref, b2_ref, w3_ref, b3_ref, o_ref):
    # fc1 + ReLU  (bf16 MXU matmul, f32 accumulation, f32 bias/ReLU)
    h1 = jnp.dot(x_ref[...].astype(jnp.bfloat16), w1_ref[...],
                 preferred_element_type=jnp.float32)
    h1 = jnp.maximum(h1 + b1_ref[...], 0.0)
    # fc2 + ReLU
    h2 = jnp.dot(h1.astype(jnp.bfloat16), w2_ref[...],
                 preferred_element_type=jnp.float32)
    h2 = jnp.maximum(h2 + b2_ref[...], 0.0)
    # fc3 (logits; output lane-padded to 128 -> dense, unmasked store)
    o_ref[...] = jnp.dot(h2.astype(jnp.bfloat16), w3_ref[...],
                         preferred_element_type=jnp.float32) + b3_ref[...]


def prepare_params(params):
    """One-time weight prep (kept OUT of the per-call path):
       - transpose nn.Linear's (out, in) weights to (in, out),
       - cast weights to bf16 for the MXU (accumulation stays f32 in-kernel),
       - keep biases f32 as (1, out) rows for 2-D broadcasting,
       - zero-pad fc3's output dim from num_classes to 128 lanes."""
    w1, b1, w2, b2, w3, b3 = params
    num_classes = w3.shape[0]
    out_pad = _round_up(num_classes, _LANES)

    w1_t = w1.T.astype(jnp.bfloat16)
    w2_t = w2.T.astype(jnp.bfloat16)
    w3_t = jnp.zeros((w3.shape[1], out_pad), jnp.bfloat16)
    w3_t = w3_t.at[:, :num_classes].set(w3.T.astype(jnp.bfloat16))

    b1_r = b1[None, :].astype(jnp.float32)
    b2_r = b2[None, :].astype(jnp.float32)
    b3_r = jnp.zeros((1, out_pad), jnp.float32)
    b3_r = b3_r.at[:, :num_classes].set(b3[None, :].astype(jnp.float32))

    return (w1_t, b1_r, w2_t, b2_r, w3_t, b3_r), num_classes


@functools.partial(jax.jit, static_argnames=("num_classes", "block_m"))
def mlp_forward(x_nchw, kernel_params, num_classes=10, block_m=256):
    """x_nchw: (N, 1, 28, 28) float32.  Returns logits (N, num_classes) float32."""
    w1_t, b1_r, w2_t, b2_r, w3_t, b3_r = kernel_params
    n = x_nchw.shape[0]
    x = x_nchw.reshape(n, -1).astype(jnp.float32)  # (N, 784), same as torch view
    k = x.shape[1]
    h = w1_t.shape[1]
    out_pad = w3_t.shape[1]

    # Batch tile: multiple of 8 sublanes; capped at block_m (default 256).
    tm = min(block_m, _round_up(n, 8))
    n_pad = _round_up(n, tm)
    if n_pad != n:
        x = jnp.pad(x, ((0, n_pad - n), (0, 0)))
    grid = (n_pad // tm,)

    flops = 2 * n_pad * (k * h + h * h + h * out_pad)
    bytes_accessed = (x.size * 4                                   # x tiles (f32)
                      + (w1_t.size + w2_t.size + w3_t.size) * 2    # bf16 weights
                      + (b1_r.size + b2_r.size + b3_r.size) * 4    # f32 biases
                      + n_pad * out_pad * 4)                       # logits out

    out = pl.pallas_call(
        mlp_kernel,
        out_shape=jax.ShapeDtypeStruct((n_pad, out_pad), jnp.float32),
        grid=grid,
        in_specs=[
            pl.BlockSpec((tm, k), lambda i: (i, 0)),       # x: tiled over batch
            pl.BlockSpec((k, h), lambda i: (0, 0)),        # W1: VMEM-resident
            pl.BlockSpec((1, h), lambda i: (0, 0)),        # b1
            pl.BlockSpec((h, h), lambda i: (0, 0)),        # W2
            pl.BlockSpec((1, h), lambda i: (0, 0)),        # b2
            pl.BlockSpec((h, out_pad), lambda i: (0, 0)),  # W3 (lane-padded)
            pl.BlockSpec((1, out_pad), lambda i: (0, 0)),  # b3 (lane-padded)
        ],
        out_specs=pl.BlockSpec((tm, out_pad), lambda i: (i, 0)),
        compiler_params=pltpu.CompilerParams(
            dimension_semantics=("parallel",),   # batch tiles are independent
            vmem_limit_bytes=32 << 20,           # actual usage ~3 MiB at TM=256
        ),
        cost_estimate=pl.CostEstimate(
            flops=flops, transcendentals=0, bytes_accessed=bytes_accessed),
    )(x, w1_t, b1_r, w2_t, b2_r, w3_t, b3_r)

    return out[:n, :num_classes]


def init_params(key, input_size=784, hidden_size=256, num_classes=10):
    """Deterministic init mimicking nn.Linear's default U(-1/sqrt(fan_in), +...)."""
    ks = jax.random.split(key, 6)

    def linear(kw, kb, fan_in, fan_out):
        bound = 1.0 / jnp.sqrt(fan_in)
        w = jax.random.uniform(kw, (fan_out, fan_in), jnp.float32, -bound, bound)
        b = jax.random.uniform(kb, (fan_out,), jnp.float32, -bound, bound)
        return w, b

    w1, b1 = linear(ks[0], ks[1], input_size, hidden_size)
    w2, b2 = linear(ks[2], ks[3], hidden_size, hidden_size)
    w3, b3 = linear(ks[4], ks[5], hidden_size, num_classes)
    return (w1, b1, w2, b2, w3, b3)


def mlp_reference(x_nchw, params):
    w1, b1, w2, b2, w3, b3 = params
    x = x_nchw.reshape(x_nchw.shape[0], -1)
    h1 = jnp.maximum(x @ w1.T + b1, 0.0)
    h2 = jnp.maximum(h1 @ w2.T + b2, 0.0)
    return h2 @ w3.T + b3


if __name__ == "__main__":
    key = jax.random.PRNGKey(0)
    k_x, k_p, k_x2 = jax.random.split(key, 3)

    params = init_params(k_p)
    kernel_params, num_classes = prepare_params(params)

    # Small MNIST-shaped batch (single tile, TM=8).
    N = 8
    x = jax.random.normal(k_x, (N, 1, 28, 28), jnp.float32)
    out = jax.block_until_ready(mlp_forward(x, kernel_params, num_classes=num_classes))
    ref = mlp_reference(x, params)
    assert out.shape == (N, 10)
    # bf16 MXU inputs with f32 accumulation -> looser tolerance vs the f32 reference.
    assert jnp.allclose(out, ref, atol=2e-2, rtol=2e-2), "mismatch vs JAX reference (N=8)"

    # Second batch exercising the multi-tile grid + batch-padding path (TM=256, grid=2).
    N2 = 300
    x2 = jax.random.normal(k_x2, (N2, 1, 28, 28), jnp.float32)
    out2 = jax.block_until_ready(mlp_forward(x2, kernel_params, num_classes=num_classes))
    ref2 = mlp_reference(x2, params)
    assert out2.shape == (N2, 10)
    assert jnp.allclose(out2, ref2, atol=2e-2, rtol=2e-2), "mismatch vs JAX reference (N=300)"

    print("KERNEL_OK")
</pallas_src>

<mosaic_0001>
module attributes {stable_mosaic.version = 11 : i64} {
  func.func @mlp_kernel(%arg0: i32, %arg1: memref<8x784xf32, #tpu.memory_space<vmem>>, %arg2: memref<784x256xbf16, #tpu.memory_space<vmem>>, %arg3: memref<1x256xf32, #tpu.memory_space<vmem>>, %arg4: memref<256x256xbf16, #tpu.memory_space<vmem>>, %arg5: memref<1x256xf32, #tpu.memory_space<vmem>>, %arg6: memref<256x128xbf16, #tpu.memory_space<vmem>>, %arg7: memref<1x128xf32, #tpu.memory_space<vmem>>, %arg8: memref<8x128xf32, #tpu.memory_space<vmem>>) attributes {dimension_semantics = [#tpu.dimension_semantics<parallel>], iteration_bounds = array<i64: 1>, scalar_prefetch = 0 : i64, scratch_operands = 0 : i64, tpu.core_type = #tpu.core_type<tc>, window_params = [{transform_indices = @transform_0, window_bounds = array<i64: 8, 784>}, {pipeline_mode = #tpu.pipeline_mode<synchronous>, transform_indices = @transform_1, window_bounds = array<i64: 784, 256>}, {pipeline_mode = #tpu.pipeline_mode<synchronous>, transform_indices = @transform_2, window_bounds = array<i64: 1, 256>}, {pipeline_mode = #tpu.pipeline_mode<synchronous>, transform_indices = @transform_3, window_bounds = array<i64: 256, 256>}, {pipeline_mode = #tpu.pipeline_mode<synchronous>, transform_indices = @transform_4, window_bounds = array<i64: 1, 256>}, {pipeline_mode = #tpu.pipeline_mode<synchronous>, transform_indices = @transform_5, window_bounds = array<i64: 256, 128>}, {pipeline_mode = #tpu.pipeline_mode<synchronous>, transform_indices = @transform_6, window_bounds = array<i64: 1, 128>}, {transform_indices = @transform_7, window_bounds = array<i64: 8, 128>}]} {
    %c0 = arith.constant 0 : index
    %c0_0 = arith.constant 0 : index
    %0 = vector.load %arg1[%c0, %c0_0] : memref<8x784xf32, #tpu.memory_space<vmem>>, vector<8x784xf32>
    %1 = arith.truncf %0 : vector<8x784xf32> to vector<8x784xbf16>
    %c0_1 = arith.constant 0 : index
    %c0_2 = arith.constant 0 : index
    %2 = vector.load %arg2[%c0_1, %c0_2] : memref<784x256xbf16, #tpu.memory_space<vmem>>, vector<784x256xbf16>
    %cst = arith.constant dense<0.000000e+00> : vector<8x256xf32>
    %3 = tpu.matmul %1, %2, %cst {dimension_numbers = #tpu.dot_dimension_numbers<[1], [0], [0], [1], [0, 0, 1, 1], [], []>} : vector<8x784xbf16>, vector<784x256xbf16>, vector<8x256xf32> -> vector<8x256xf32>
    %c0_3 = arith.constant 0 : index
    %c0_4 = arith.constant 0 : index
    %4 = vector.load %arg3[%c0_3, %c0_4] : memref<1x256xf32, #tpu.memory_space<vmem>>, vector<1x256xf32>
    %5 = vector.broadcast %4 : vector<1x256xf32> to vector<8x256xf32>
    %6 = arith.addf %3, %5 : vector<8x256xf32>
    %cst_5 = arith.constant 0.000000e+00 : f32
    %7 = vector.broadcast %cst_5 : f32 to vector<8x256xf32>
    %8 = arith.maximumf %6, %7 : vector<8x256xf32>
    %9 = arith.truncf %8 : vector<8x256xf32> to vector<8x256xbf16>
    %c0_6 = arith.constant 0 : index
    %c0_7 = arith.constant 0 : index
    %10 = vector.load %arg4[%c0_6, %c0_7] : memref<256x256xbf16, #tpu.memory_space<vmem>>, vector<256x256xbf16>
    %cst_8 = arith.constant dense<0.000000e+00> : vector<8x256xf32>
    %11 = tpu.matmul %9, %10, %cst_8 {dimension_numbers = #tpu.dot_dimension_numbers<[1], [0], [0], [1], [0, 0, 1, 1], [], []>} : vector<8x256xbf16>, vector<256x256xbf16>, vector<8x256xf32> -> vector<8x256xf32>
    %c0_9 = arith.constant 0 : index
    %c0_10 = arith.constant 0 : index
    %12 = vector.load %arg5[%c0_9, %c0_10] : memref<1x256xf32, #tpu.memory_space<vmem>>, vector<1x256xf32>
    %13 = vector.broadcast %12 : vector<1x256xf32> to vector<8x256xf32>
    %14 = arith.addf %11, %13 : vector<8x256xf32>
    %cst_11 = arith.constant 0.000000e+00 : f32
    %15 = vector.broadcast %cst_11 : f32 to vector<8x256xf32>
    %16 = arith.maximumf %14, %15 : vector<8x256xf32>
    %17 = arith.truncf %16 : vector<8x256xf32> to vector<8x256xbf16>
    %c0_12 = arith.constant 0 : index
    %c0_13 = arith.constant 0 : index
    %18 = vector.load %arg6[%c0_12, %c0_13] : memref<256x128xbf16, #tpu.memory_space<vmem>>, vector<256x128xbf16>
    %cst_14 = arith.constant dense<0.000000e+00> : vector<8x128xf32>
    %19 = tpu.matmul %17, %18, %cst_14 {dimension_numbers = #tpu.dot_dimension_numbers<[1], [0], [0], [1], [0, 0, 1, 1], [], []>} : vector<8x256xbf16>, vector<256x128xbf16>, vector<8x128xf32> -> vector<8x128xf32>
    %c0_15 = arith.constant 0 : index
    %c0_16 = arith.constant 0 : index
    %20 = vector.load %arg7[%c0_15, %c0_16] : memref<1x128xf32, #tpu.memory_space<vmem>>, vector<1x128xf32>
    %21 = vector.broadcast %20 : vector<1x128xf32> to vector<8x128xf32>
    %22 = arith.addf %19, %21 : vector<8x128xf32>
    %c0_17 = arith.constant 0 : index
    %c0_18 = arith.constant 0 : index
    %23 = vector.load %arg8[%c0_17, %c0_18] : memref<8x128xf32, #tpu.memory_space<vmem>>, vector<8x128xf32>
    tpu.vector_store %arg8[%c0_17, %c0_18], %22 {strides = array<i32>} : memref<8x128xf32, #tpu.memory_space<vmem>>, vector<8x128xf32>,
    return
  }
  func.func @transform_0(%arg0: i32) -> (i32, i32) {
    %c0_i32 = arith.constant 0 : i32
    %c0_i32_0 = arith.constant 0 : i32
    return %arg0, %c0_i32 : i32, i32
  }
  func.func @transform_1(%arg0: i32) -> (i32, i32) {
    %c0_i32 = arith.constant 0 : i32
    %c0_i32_0 = arith.constant 0 : i32
    %c0_i32_1 = arith.constant 0 : i32
    return %c0_i32, %c0_i32_0 : i32, i32
  }
  func.func @transform_2(%arg0: i32) -> (i32, i32) {
    %c0_i32 = arith.constant 0 : i32
    %c0_i32_0 = arith.constant 0 : i32
    %c0_i32_1 = arith.constant 0 : i32
    return %c0_i32, %c0_i32_0 : i32, i32
  }
  func.func @transform_3(%arg0: i32) -> (i32, i32) {
    %c0_i32 = arith.constant 0 : i32
    %c0_i32_0 = arith.constant 0 : i32
    %c0_i32_1 = arith.constant 0 : i32
    return %c0_i32, %c0_i32_0 : i32, i32
  }
  func.func @transform_4(%arg0: i32) -> (i32, i32) {
    %c0_i32 = arith.constant 0 : i32
    %c0_i32_0 = arith.constant 0 : i32
    %c0_i32_1 = arith.constant 0 : i32
    return %c0_i32, %c0_i32_0 : i32, i32
  }
  func.func @transform_5(%arg0: i32) -> (i32, i32) {
    %c0_i32 = arith.constant 0 : i32
    %c0_i32_0 = arith.constant 0 : i32
    %c0_i32_1 = arith.constant 0 : i32
    return %c0_i32, %c0_i32_0 : i32, i32
  }
  func.func @transform_6(%arg0: i32) -> (i32, i32) {
    %c0_i32 = arith.constant 0 : i32
    %c0_i32_0 = arith.constant 0 : i32
    %c0_i32_1 = arith.constant 0 : i32
    return %c0_i32, %c0_i32_0 : i32, i32
  }
  func.func @transform_7(%arg0: i32) -> (i32, i32) {
    %c0_i32 = arith.constant 0 : i32
    %c0_i32_0 = arith.constant 0 : i32
    return %arg0, %c0_i32 : i32, i32
  }
}

</mosaic_0001>

<llo_original>
// kernel: mlp_forward.1
$region0: #{mlp_forward.1}
  #allocation0 [shape = 'u32[]', space=smem, size = 0x4, offset = 0x4, fixed_abs, tag = 'smem constant byte address 0x4 - core index']
  #allocation1 [shape = 'u32[144,128]{1,0:T(1,128)}', space=vmem, size = 0x12000, scoped, tag = 'internal scratch']
  %s0 = inlined_call_operand.vmem [shape: f32[8,784], index: 0, kind: input, shape index: {}]
  %s1 = inlined_call_operand.vmem [shape: bf16[784,256], index: 1, kind: input, shape index: {}]
  %s2 = inlined_call_operand.vmem [shape: f32[1,256], index: 2, kind: input, shape index: {}]
  %s3 = inlined_call_operand.hbm [shape: bf16[256,256], index: 3, kind: input, shape index: {}]
  %s4 = inlined_call_operand.vmem [shape: f32[1,256], index: 4, kind: input, shape index: {}]
  %s5 = inlined_call_operand.hbm [shape: bf16[256,128], index: 5, kind: input, shape index: {}]
  %s6 = inlined_call_operand.vmem [shape: f32[1,128], index: 6, kind: input, shape index: {}]
  %s7 = inlined_call_operand.hbm [shape: f32[8,128], index: 7, kind: output, shape index: {}]
  %s8 = sld [smem:[#allocation0]]
  $region46: #{mlp_forward.1} parent=0
    _
  %s10 = ssub.s32 1, %s8
  %s11 = scalar_select 0, %s10, %s8
  $region1: #{mlp_forward.1} parent=0
    #allocation2 [shape = 'u8[131072]{0}', space=vmem, size = 0x20000, scoped, tag = 'input window, operand 3, single buffered']
    #allocation3 [shape = 's32[1]{0}', space=sflag, size = 0x4, scoped, tag = 'scoped memory for mlp_forward.1']
    #allocation4 [shape = 's32[1]{0}', space=sflag, size = 0x4, scoped, tag = 'scoped memory for mlp_forward.1']
    #allocation5 [shape = 'u8[65536]{0}', space=vmem, size = 0x10000, scoped, tag = 'input window, operand 5, single buffered']
    #allocation6 [shape = 's32[1]{0}', space=sflag, size = 0x4, scoped, tag = 'scoped memory for mlp_forward.1']
    #allocation7 [shape = 'u8[4096]{0}', space=vmem, size = 0x1000, scoped, tag = 'output window, operand 0, single buffered']
    %12 = vsyncpa [#allocation3], 0
    %13 = vsyncpa [#allocation6], 0
    %14 = vsyncpa [#allocation4], 0
    // Predicated region
    $region2: #{mlp_forward.1} parent=1 // pred_check
      _
    $region3: #{mlp_forward.1} parent=1 // pred_check_branch
      %16 = sbr.rel (0) target = $region5
    $region4: #{mlp_forward.1} parent=1 // pred_region
      _
    $region5: #{mlp_forward.1} parent=1 // pred_fallthru
      _
    // Predicated region
    $region6: #{mlp_forward.1} parent=1 // pred_check
      _
    $region7: #{mlp_forward.1} parent=1 // pred_check_branch
      %18 = sbr.rel (0) target = $region9
    $region8: #{mlp_forward.1} parent=1 // pred_region
      _
    $region9: #{mlp_forward.1} parent=1 // pred_fallthru
      _
    // Predicated region
    $region10: #{mlp_forward.1} parent=1 // pred_check
      _
    $region11: #{mlp_forward.1} parent=1 // pred_check_branch
      %20 = sbr.rel (0) target = $region13
    $region12: #{mlp_forward.1} parent=1 // pred_region
      _
    $region13: #{mlp_forward.1} parent=1 // pred_fallthru
      _
    // Predicated region
    $region14: #{mlp_forward.1} parent=1 // pred_check
      _
    $region15: #{mlp_forward.1} parent=1 // pred_check_branch
      %22 = sbr.rel (0) target = $region17
    $region16: #{mlp_forward.1} parent=1 // pred_region
      %s24 = ssub.s32 4096, 4096
      %25 = vsyncadd [#allocation3], %s24
      %s26 = sshll.u32 [#allocation2], 4
      %s27 = int_to_ptr.vmem [resolvable:$true] %s26
      %32 = dma.hbm_to_vmem [thread:$0]  %s3, 4096, %s27, [#allocation3], 128, 128, 8
    $region17: #{mlp_forward.1} parent=1 // pred_fallthru
      _
    // Predicated region
    $region18: #{mlp_forward.1} parent=1 // pred_check
      _
    $region19: #{mlp_forward.1} parent=1 // pred_check_branch
      %34 = sbr.rel (0) target = $region21
    $region20: #{mlp_forward.1} parent=1 // pred_region
      _
    $region21: #{mlp_forward.1} parent=1 // pred_fallthru
      _
    // Predicated region
    $region22: #{mlp_forward.1} parent=1 // pred_check
      _
    $region23: #{mlp_forward.1} parent=1 // pred_check_branch
      %36 = sbr.rel (0) target = $region25
    $region24: #{mlp_forward.1} parent=1 // pred_region
      %s38 = ssub.s32 2048, 2048
      %39 = vsyncadd [#allocation6], %s38
      %s40 = sshll.u32 [#allocation5], 4
      %s41 = int_to_ptr.vmem [resolvable:$true] %s40
      %46 = dma.hbm_to_vmem [thread:$0]  %s5, 2048, %s41, [#allocation6], 64, 64, 4
    $region25: #{mlp_forward.1} parent=1 // pred_fallthru
      _
    // Predicated region
    $region26: #{mlp_forward.1} parent=1 // pred_check
      _
    $region27: #{mlp_forward.1} parent=1 // pred_check_branch
      %48 = sbr.rel (0) target = $region29
    $region28: #{mlp_forward.1} parent=1 // pred_region
      _
    $region29: #{mlp_forward.1} parent=1 // pred_fallthru
      _
    // Predicated region
    $region30: #{mlp_forward.1} parent=1 // pred_check
      _
    $region31: #{mlp_forward.1} parent=1 // pred_check_branch
      %50 = sbr.rel (0) target = $region33
    $region32: #{mlp_forward.1} parent=1 // pred_region
      %51 = dma.done [#allocation3], 4096
    $region33: #{mlp_forward.1} parent=1 // pred_fallthru
      _
    // Predicated region
    $region34: #{mlp_forward.1} parent=1 // pred_check
      _
    $region35: #{mlp_forward.1} parent=1 // pred_check_branch
      %53 = sbr.rel (0) target = $region37
    $region36: #{mlp_forward.1} parent=1 // pred_region
      %54 = dma.done [#allocation6], 2048
    $region37: #{mlp_forward.1} parent=1 // pred_fallthru
      _
    %v56 = vld [vmem:[%s0] sm:$0xff]
    %v57 = vld [vmem:[%s0 + $0x8] sm:$0xff]
    %v58 = vld [vmem:[%s0 + $0x10] sm:$0xff]
    %v59 = vld [vmem:[%s0 + $0x18] sm:$0xff]
    %v60 = vld [vmem:[%s0 + $0x20] sm:$0xff]
    %v61 = vld [vmem:[%s0 + $0x28] sm:$0xff]
    %v62 = vld [vmem:[%s0 + $0x30] sm:$0xff]
    %v63 = vpack.c.bf16 %v56, %v56
    %v64 = vpack.c.bf16 %v57, %v57
    %v65 = vpack.c.bf16 %v58, %v58
    %v66 = vpack.c.bf16 %v59, %v59
    %v67 = vpack.c.bf16 %v60, %v60
    %v68 = vpack.c.bf16 %v61, %v61
    %v69 = vpack.c.bf16 %v62, %v62
    %v70 = vld [vmem:[%s1] sm:$0xff]
    %v71 = vld [vmem:[%s1 + $0x8] sm:$0xff]
    %v72 = vld [vmem:[%s1 + $0x10] sm:$0xff]
    %v73 = vld [vmem:[%s1 + $0x18] sm:$0xff]
    %v74 = vld [vmem:[%s1 + $0x20] sm:$0xff]
    %v75 = vld [vmem:[%s1 + $0x28] sm:$0xff]
    %v76 = vld [vmem:[%s1 + $0x30] sm:$0xff]
    %v77 = vld [vmem:[%s1 + $0x38] sm:$0xff]
    %v78 = vld [vmem:[%s1 + $0x40] sm:$0xff]
    %v79 = vld [vmem:[%s1 + $0x48] sm:$0xff]
    %v80 = vld [vmem:[%s1 + $0x50] sm:$0xff]
    %v81 = vld [vmem:[%s1 + $0x58] sm:$0xff]
    %v82 = vld [vmem:[%s1 + $0x60] sm:$0xff]
    %v83 = vld [vmem:[%s1 + $0x68] sm:$0xff]
    %v84 = vld [vmem:[%s1 + $0x70] sm:$0xff]
    %v85 = vld [vmem:[%s1 + $0x78] sm:$0xff]
    %v86 = vld [vmem:[%s1 + $0x80] sm:$0xff]
    %v87 = vld [vmem:[%s1 + $0x88] sm:$0xff]
    %v88 = vld [vmem:[%s1 + $0x90] sm:$0xff]
    %v89 = vld [vmem:[%s1 + $0x98] sm:$0xff]
    %v90 = vld [vmem:[%s1 + $0xa0] sm:$0xff]
    %v91 = vld [vmem:[%s1 + $0xa8] sm:$0xff]
    %v92 = vld [vmem:[%s1 + $0xb0] sm:$0xff]
    %v93 = vld [vmem:[%s1 + $0xb8] sm:$0xff]
    %v94 = vld [vmem:[%s1 + $0xc0] sm:$0xff]
    %v95 = vld [vmem:[%s1 + $0xc8] sm:$0xff]
    %v96 = vld [vmem:[%s1 + $0xd0] sm:$0xff]
    %v97 = vld [vmem:[%s1 + $0xd8] sm:$0xff]
    %v98 = vld [vmem:[%s1 + $0xe0] sm:$0xff]
    %v99 = vld [vmem:[%s1 + $0xe8] sm:$0xff]
    %v100 = vld [vmem:[%s1 + $0xf0] sm:$0xff]
    %v101 = vld [vmem:[%s1 + $0xf8] sm:$0xff]
    %v102 = vld [vmem:[%s1 + $0x100] sm:$0xff]
    %v103 = vld [vmem:[%s1 + $0x108] sm:$0xff]
    %v104 = vld [vmem:[%s1 + $0x110] sm:$0xff]
    %v105 = vld [vmem:[%s1 + $0x118] sm:$0xff]
    %v106 = vld [vmem:[%s1 + $0x120] sm:$0xff]
    %v107 = vld [vmem:[%s1 + $0x128] sm:$0xff]
    %v108 = vld [vmem:[%s1 + $0x130] sm:$0xff]
    %v109 = vld [vmem:[%s1 + $0x138] sm:$0xff]
    %v110 = vld [vmem:[%s1 + $0x140] sm:$0xff]
    %v111 = vld [vmem:[%s1 + $0x148] sm:$0xff]
    %v112 = vld [vmem:[%s1 + $0x150] sm:$0xff]
    %v113 = vld [vmem:[%s1 + $0x158] sm:$0xff]
    %v114 = vld [vmem:[%s1 + $0x160] sm:$0xff]
    %v115 = vld [vmem:[%s1 + $0x168] sm:$0xff]
    %v116 = vld [vmem:[%s1 + $0x170] sm:$0xff]
    %v117 = vld [vmem:[%s1 + $0x178] sm:$0xff]
    %v118 = vld [vmem:[%s1 + $0x180] sm:$0xff]
    %v119 = vld [vmem:[%s1 + $0x188] sm:$0xff]
    %v120 = vld [vmem:[%s1 + $0x190] sm:$0xff]
    %v121 = vld [vmem:[%s1 + $0x198] sm:$0xff]
    %v122 = vld [vmem:[%s1 + $0x1a0] sm:$0xff]
    %v123 = vld [vmem:[%s1 + $0x1a8] sm:$0xff]
    %v124 = vld [vmem:[%s1 + $0x1b0] sm:$0xff]
    %v125 = vld [vmem:[%s1 + $0x1b8] sm:$0xff]
    %v126 = vld [vmem:[%s1 + $0x1c0] sm:$0xff]
    %v127 = vld [vmem:[%s1 + $0x1c8] sm:$0xff]
    %v128 = vld [vmem:[%s1 + $0x1d0] sm:$0xff]
    %v129 = vld [vmem:[%s1 + $0x1d8] sm:$0xff]
    %v130 = vld [vmem:[%s1 + $0x1e0] sm:$0xff]
    %v131 = vld [vmem:[%s1 + $0x1e8] sm:$0xff]
    %v132 = vld [vmem:[%s1 + $0x1f0] sm:$0xff]
    %v133 = vld [vmem:[%s1 + $0x1f8] sm:$0xff]
    %v134 = vld [vmem:[%s1 + $0x200] sm:$0xff]
    %v135 = vld [vmem:[%s1 + $0x208] sm:$0xff]
    %v136 = vld [vmem:[%s1 + $0x210] sm:$0xff]
    %v137 = vld [vmem:[%s1 + $0x218] sm:$0xff]
    %v138 = vld [vmem:[%s1 + $0x220] sm:$0xff]
    %v139 = vld [vmem:[%s1 + $0x228] sm:$0xff]
    %v140 = vld [vmem:[%s1 + $0x230] sm:$0xff]
    %v141 = vld [vmem:[%s1 + $0x238] sm:$0xff]
    %v142 = vld [vmem:[%s1 + $0x240] sm:$0xff]
    %v143 = vld [vmem:[%s1 + $0x248] sm:$0xff]
    %v144 = vld [vmem:[%s1 + $0x250] sm:$0xff]
    %v145 = vld [vmem:[%s1 + $0x258] sm:$0xff]
    %v146 = vld [vmem:[%s1 + $0x260] sm:$0xff]
    %v147 = vld [vmem:[%s1 + $0x268] sm:$0xff]
    %v148 = vld [vmem:[%s1 + $0x270] sm:$0xff]
    %v149 = vld [vmem:[%s1 + $0x278] sm:$0xff]
    %v150 = vld [vmem:[%s1 + $0x280] sm:$0xff]
    %v151 = vld [vmem:[%s1 + $0x288] sm:$0xff]
    %v152 = vld [vmem:[%s1 + $0x290] sm:$0xff]
    %v153 = vld [vmem:[%s1 + $0x298] sm:$0xff]
    %v154 = vld [vmem:[%s1 + $0x2a0] sm:$0xff]
    %v155 = vld [vmem:[%s1 + $0x2a8] sm:$0xff]
    %v156 = vld [vmem:[%s1 + $0x2b0] sm:$0xff]
    %v157 = vld [vmem:[%s1 + $0x2b8] sm:$0xff]
    %v158 = vld [vmem:[%s1 + $0x2c0] sm:$0xff]
    %v159 = vld [vmem:[%s1 + $0x2c8] sm:$0xff]
    %v160 = vld [vmem:[%s1 + $0x2d0] sm:$0xff]
    %v161 = vld [vmem:[%s1 + $0x2d8] sm:$0xff]
    %v162 = vld [vmem:[%s1 + $0x2e0] sm:$0xff]
    %v163 = vld [vmem:[%s1 + $0x2e8] sm:$0xff]
    %v164 = vld [vmem:[%s1 + $0x2f0] sm:$0xff]
    %v165 = vld [vmem:[%s1 + $0x2f8] sm:$0xff]
    %v166 = vld [vmem:[%s1 + $0x300] sm:$0xff]
    %v167 = vld [vmem:[%s1 + $0x308] sm:$0xff]
    %v168 = vld [vmem:[%s2] sm:$0x3]
    %v170 = vlaneseq
    %v171 = vshrl.u32 %v170, 7
    %v172 = vsub.s32 0, %v171
    %v173 = vrot.slane %v168, %v172
    %v174 = vlaneseq
    %v175 = vshrl.u32 %v174, 7
    %v176 = vsub.s32 1, %v175
    %v177 = vrot.slane %v168, %v176
    %v278 = vunpack.c.l.b16 %v70
    %v279 = vunpack.c.h.b16 %v70
    %v280 = vunpack.c.l.b16 %v71
    %v281 = vunpack.c.h.b16 %v71
    %v282 = vunpack.c.l.b16 %v72
    %v283 = vunpack.c.h.b16 %v72
    %v284 = vunpack.c.l.b16 %v73
    %v285 = vunpack.c.h.b16 %v73
    %v286 = vunpack.c.l.b16 %v74
    %v287 = vunpack.c.h.b16 %v74
    %v288 = vunpack.c.l.b16 %v75
    %v289 = vunpack.c.h.b16 %v75
    %v290 = vunpack.c.l.b16 %v76
    %v291 = vunpack.c.h.b16 %v76
    %v292 = vunpack.c.l.b16 %v77
    %v293 = vunpack.c.h.b16 %v77
    %v294 = vunpack.c.l.b16 %v78
    %v295 = vunpack.c.h.b16 %v78
    %v296 = vunpack.c.l.b16 %v79
    %v297 = vunpack.c.h.b16 %v79
    %v298 = vunpack.c.l.b16 %v80
    %v299 = vunpack.c.h.b16 %v80
    %v300 = vunpack.c.l.b16 %v81
    %v301 = vunpack.c.h.b16 %v81
    %v302 = vunpack.c.l.b16 %v82
    %v303 = vunpack.c.h.b16 %v82
    %v304 = vunpack.c.l.b16 %v83
    %v305 = vunpack.c.h.b16 %v83
    %v306 = vunpack.c.l.b16 %v84
    %v307 = vunpack.c.h.b16 %v84
    %v308 = vunpack.c.l.b16 %v85
    %v309 = vunpack.c.h.b16 %v85
    %v310 = vunpack.c.l.b16 %v86
    %v311 = vunpack.c.h.b16 %v86
    %v312 = vunpack.c.l.b16 %v87
    %v313 = vunpack.c.h.b16 %v87
    %v314 = vunpack.c.l.b16 %v88
    %v315 = vunpack.c.h.b16 %v88
    %v316 = vunpack.c.l.b16 %v89
    %v317 = vunpack.c.h.b16 %v89
    %v318 = vunpack.c.l.b16 %v90
    %v319 = vunpack.c.h.b16 %v90
    %v320 = vunpack.c.l.b16 %v91
    %v321 = vunpack.c.h.b16 %v91
    %v322 = vunpack.c.l.b16 %v92
    %v323 = vunpack.c.h.b16 %v92
    %v324 = vunpack.c.l.b16 %v93
    %v325 = vunpack.c.h.b16 %v93
    %v326 = vunpack.c.l.b16 %v94
    %v327 = vunpack.c.h.b16 %v94
    %v328 = vunpack.c.l.b16 %v95
    %v329 = vunpack.c.h.b16 %v95
    %v330 = vunpack.c.l.b16 %v96
    %v331 = vunpack.c.h.b16 %v96
    %v332 = vunpack.c.l.b16 %v97
    %v333 = vunpack.c.h.b16 %v97
    %v334 = vunpack.c.l.b16 %v98
    %v335 = vunpack.c.h.b16 %v98
    %v336 = vunpack.c.l.b16 %v99
    %v337 = vunpack.c.h.b16 %v99
    %v338 = vunpack.c.l.b16 %v100
    %v339 = vunpack.c.h.b16 %v100
    %v340 = vunpack.c.l.b16 %v101
    %v341 = vunpack.c.h.b16 %v101
    %v342 = vunpack.c.l.b16 %v102
    %v343 = vunpack.c.h.b16 %v102
    %v344 = vunpack.c.l.b16 %v103
    %v345 = vunpack.c.h.b16 %v103
    %v346 = vunpack.c.l.b16 %v104
    %v347 = vunpack.c.h.b16 %v104
    %v348 = vunpack.c.l.b16 %v105
    %v349 = vunpack.c.h.b16 %v105
    %v350 = vunpack.c.l.b16 %v106
    %v351 = vunpack.c.h.b16 %v106
    %v352 = vunpack.c.l.b16 %v107
    %v353 = vunpack.c.h.b16 %v107
    %v354 = vunpack.c.l.b16 %v108
    %v355 = vunpack.c.h.b16 %v108
    %v356 = vunpack.c.l.b16 %v109
    %v357 = vunpack.c.h.b16 %v109
    %v358 = vunpack.c.l.b16 %v110
    %v359 = vunpack.c.h.b16 %v110
    %v360 = vunpack.c.l.b16 %v111
    %v361 = vunpack.c.h.b16 %v111
    %v362 = vunpack.c.l.b16 %v112
    %v363 = vunpack.c.h.b16 %v112
    %v364 = vunpack.c.l.b16 %v113
    %v365 = vunpack.c.h.b16 %v113
    %v366 = vunpack.c.l.b16 %v114
    %v367 = vunpack.c.h.b16 %v114
    %v368 = vunpack.c.l.b16 %v115
    %v369 = vunpack.c.h.b16 %v115
    %v370 = vunpack.c.l.b16 %v116
    %v371 = vunpack.c.h.b16 %v116
    %v372 = vunpack.c.l.b16 %v117
    %v373 = vunpack.c.h.b16 %v117
    %v374 = vunpack.c.l.b16 %v118
    %v375 = vunpack.c.h.b16 %v118
    %v376 = vunpack.c.l.b16 %v119
    %v377 = vunpack.c.h.b16 %v119
    %v378 = vunpack.c.l.b16 %v120
    %v379 = vunpack.c.h.b16 %v120
    %v380 = vunpack.c.l.b16 %v121
    %v381 = vunpack.c.h.b16 %v121
    %v382 = vunpack.c.l.b16 %v122
    %v383 = vunpack.c.h.b16 %v122
    %v384 = vunpack.c.l.b16 %v123
    %v385 = vunpack.c.h.b16 %v123
    %v386 = vunpack.c.l.b16 %v124
    %v387 = vunpack.c.h.b16 %v124
    %v388 = vunpack.c.l.b16 %v125
    %v389 = vunpack.c.h.b16 %v125
    %v390 = vunpack.c.l.b16 %v126
    %v391 = vunpack.c.h.b16 %v126
    %v392 = vunpack.c.l.b16 %v127
    %v393 = vunpack.c.h.b16 %v127
    %v394 = vunpack.c.l.b16 %v128
    %v395 = vunpack.c.h.b16 %v128
    %v396 = vunpack.c.l.b16 %v129
    %v397 = vunpack.c.h.b16 %v129
    %v398 = vunpack.c.l.b16 %v130
    %v399 = vunpack.c.h.b16 %v130
    %v400 = vunpack.c.l.b16 %v131
    %v401 = vunpack.c.h.b16 %v131
    %v402 = vunpack.c.l.b16 %v132
    %v403 = vunpack.c.h.b16 %v132
    %v404 = vunpack.c.l.b16 %v133
    %v405 = vunpack.c.h.b16 %v133
    %v406 = vunpack.c.l.b16 %v134
    %v407 = vunpack.c.h.b16 %v134
    %v408 = vunpack.c.l.b16 %v135
    %v409 = vunpack.c.h.b16 %v135
    %v410 = vunpack.c.l.b16 %v136
    %v411 = vunpack.c.h.b16 %v136
    %v412 = vunpack.c.l.b16 %v137
    %v413 = vunpack.c.h.b16 %v137
    %v414 = vunpack.c.l.b16 %v138
    %v415 = vunpack.c.h.b16 %v138
    %v416 = vunpack.c.l.b16 %v139
    %v417 = vunpack.c.h.b16 %v139
    %v418 = vunpack.c.l.b16 %v140
    %v419 = vunpack.c.h.b16 %v140
    %v420 = vunpack.c.l.b16 %v141
    %v421 = vunpack.c.h.b16 %v141
    %v422 = vunpack.c.l.b16 %v142
    %v423 = vunpack.c.h.b16 %v142
    %v424 = vunpack.c.l.b16 %v143
    %v425 = vunpack.c.h.b16 %v143
    %v426 = vunpack.c.l.b16 %v144
    %v427 = vunpack.c.h.b16 %v144
    %v428 = vunpack.c.l.b16 %v145
    %v429 = vunpack.c.h.b16 %v145
    %v430 = vunpack.c.l.b16 %v146
    %v431 = vunpack.c.h.b16 %v146
    %v432 = vunpack.c.l.b16 %v147
    %v433 = vunpack.c.h.b16 %v147
    %v434 = vunpack.c.l.b16 %v148
    %v435 = vunpack.c.h.b16 %v148
    %v436 = vunpack.c.l.b16 %v149
    %v437 = vunpack.c.h.b16 %v149
    %v438 = vunpack.c.l.b16 %v150
    %v439 = vunpack.c.h.b16 %v150
    %v440 = vunpack.c.l.b16 %v151
    %v441 = vunpack.c.h.b16 %v151
    %v442 = vunpack.c.l.b16 %v152
    %v443 = vunpack.c.h.b16 %v152
    %v444 = vunpack.c.l.b16 %v153
    %v445 = vunpack.c.h.b16 %v153
    %v446 = vunpack.c.l.b16 %v154
    %v447 = vunpack.c.h.b16 %v154
    %v448 = vunpack.c.l.b16 %v155
    %v449 = vunpack.c.h.b16 %v155
    %v450 = vunpack.c.l.b16 %v156
    %v451 = vunpack.c.h.b16 %v156
    %v452 = vunpack.c.l.b16 %v157
    %v453 = vunpack.c.h.b16 %v157
    %v454 = vunpack.c.l.b16 %v158
    %v455 = vunpack.c.h.b16 %v158
    %v456 = vunpack.c.l.b16 %v159
    %v457 = vunpack.c.h.b16 %v159
    %v458 = vunpack.c.l.b16 %v160
    %v459 = vunpack.c.h.b16 %v160
    %v460 = vunpack.c.l.b16 %v161
    %v461 = vunpack.c.h.b16 %v161
    %v462 = vunpack.c.l.b16 %v162
    %v463 = vunpack.c.h.b16 %v162
    %v464 = vunpack.c.l.b16 %v163
    %v465 = vunpack.c.h.b16 %v163
    %v466 = vunpack.c.l.b16 %v164
    %v467 = vunpack.c.h.b16 %v164
    %v468 = vunpack.c.l.b16 %v165
    %v469 = vunpack.c.h.b16 %v165
    %v470 = vunpack.c.l.b16 %v166
    %v471 = vunpack.c.h.b16 %v166
    %v472 = vunpack.c.l.b16 %v167
    %v473 = vunpack.c.h.b16 %v167
    %v474 = vpack.c.b16 %v280, %v278
    %v475 = vpack.c.b16 %v281, %v279
    %v476 = vpack.c.b16 %v284, %v282
    %v477 = vpack.c.b16 %v285, %v283
    %v478 = vpack.c.b16 %v288, %v286
    %v479 = vpack.c.b16 %v289, %v287
    %v480 = vpack.c.b16 %v292, %v290
    %v481 = vpack.c.b16 %v293, %v291
    %v482 = vpack.c.b16 %v296, %v294
    %v483 = vpack.c.b16 %v297, %v295
    %v484 = vpack.c.b16 %v300, %v298
    %v485 = vpack.c.b16 %v301, %v299
    %v486 = vpack.c.b16 %v304, %v302
    %v487 = vpack.c.b16 %v305, %v303
    %v488 = vpack.c.b16 %v308, %v306
    %v489 = vpack.c.b16 %v309, %v307
    %v490 = vpack.c.b16 %v312, %v310
    %v491 = vpack.c.b16 %v313, %v311
    %v492 = vpack.c.b16 %v316, %v314
    %v493 = vpack.c.b16 %v317, %v315
    %v494 = vpack.c.b16 %v320, %v318
    %v495 = vpack.c.b16 %v321, %v319
    %v496 = vpack.c.b16 %v324, %v322
    %v497 = vpack.c.b16 %v325, %v323
    %v498 = vpack.c.b16 %v328, %v326
    %v499 = vpack.c.b16 %v329, %v327
    %v500 = vpack.c.b16 %v332, %v330
    %v501 = vpack.c.b16 %v333, %v331
    %v502 = vpack.c.b16 %v336, %v334
    %v503 = vpack.c.b16 %v337, %v335
    %v504 = vpack.c.b16 %v340, %v338
    %v505 = vpack.c.b16 %v341, %v339
    %v506 = vpack.c.b16 %v344, %v342
    %v507 = vpack.c.b16 %v345, %v343
    %v508 = vpack.c.b16 %v348, %v346
    %v509 = vpack.c.b16 %v349, %v347
    %v510 = vpack.c.b16 %v352, %v350
    %v511 = vpack.c.b16 %v353, %v351
    %v512 = vpack.c.b16 %v356, %v354
    %v513 = vpack.c.b16 %v357, %v355
    %v514 = vpack.c.b16 %v360, %v358
    %v515 = vpack.c.b16 %v361, %v359
    %v516 = vpack.c.b16 %v364, %v362
    %v517 = vpack.c.b16 %v365, %v363
    %v518 = vpack.c.b16 %v368, %v366
    %v519 = vpack.c.b16 %v369, %v367
    %v520 = vpack.c.b16 %v372, %v370
    %v521 = vpack.c.b16 %v373, %v371
    %v522 = vpack.c.b16 %v376, %v374
    %v523 = vpack.c.b16 %v377, %v375
    %v524 = vpack.c.b16 %v380, %v378
    %v525 = vpack.c.b16 %v381, %v379
    %v526 = vpack.c.b16 %v384, %v382
    %v527 = vpack.c.b16 %v385, %v383
    %v528 = vpack.c.b16 %v388, %v386
    %v529 = vpack.c.b16 %v389, %v387
    %v530 = vpack.c.b16 %v392, %v390
    %v531 = vpack.c.b16 %v393, %v391
    %v532 = vpack.c.b16 %v396, %v394
    %v533 = vpack.c.b16 %v397, %v395
    %v534 = vpack.c.b16 %v400, %v398
    %v535 = vpack.c.b16 %v401, %v399
    %v536 = vpack.c.b16 %v404, %v402
    %v537 = vpack.c.b16 %v405, %v403
    %v538 = vpack.c.b16 %v408, %v406
    %v539 = vpack.c.b16 %v409, %v407
    %v540 = vpack.c.b16 %v412, %v410
    %v541 = vpack.c.b16 %v413, %v411
    %v542 = vpack.c.b16 %v416, %v414
    %v543 = vpack.c.b16 %v417, %v415
    %v544 = vpack.c.b16 %v420, %v418
    %v545 = vpack.c.b16 %v421, %v419
    %v546 = vpack.c.b16 %v424, %v422
    %v547 = vpack.c.b16 %v425, %v423
    %v548 = vpack.c.b16 %v428, %v426
    %v549 = vpack.c.b16 %v429, %v427
    %v550 = vpack.c.b16 %v432, %v430
    %v551 = vpack.c.b16 %v433, %v431
    %v552 = vpack.c.b16 %v436, %v434
    %v553 = vpack.c.b16 %v437, %v435
    %v554 = vpack.c.b16 %v440, %v438
    %v555 = vpack.c.b16 %v441, %v439
    %v556 = vpack.c.b16 %v444, %v442
    %v557 = vpack.c.b16 %v445, %v443
    %v558 = vpack.c.b16 %v448, %v446
    %v559 = vpack.c.b16 %v449, %v447
    %v560 = vpack.c.b16 %v452, %v450
    %v561 = vpack.c.b16 %v453, %v451
    %v562 = vpack.c.b16 %v456, %v454
    %v563 = vpack.c.b16 %v457, %v455
    %v564 = vpack.c.b16 %v460, %v458
    %v565 = vpack.c.b16 %v461, %v459
    %v566 = vpack.c.b16 %v464, %v462
    %v567 = vpack.c.b16 %v465, %v463
    %v568 = vpack.c.b16 %v468, %v466
    %v569 = vpack.c.b16 %v469, %v467
    %v570 = vpack.c.b16 %v472, %v470
    %v571 = vpack.c.b16 %v473, %v471
    %vm670 = vcmask 130048
    %v672 = vsel %vm670, %v69, 0
    %674 = vmatprep.subr.bf16.mxu0 %v475
    %675 = vmatpush1.bf16.msra.mxu0 %v474
    %676 = vmatprep.subr.bf16.mxu0 %v477
    %677 = vmatpush1.bf16.msra.mxu0 %v476
    %678 = vmatprep.subr.bf16.mxu0 %v479
    %679 = vmatpush1.bf16.msra.mxu0 %v478
    %680 = vmatprep.subr.bf16.mxu0 %v481
    %681 = vmatpush1.bf16.msra.mxu0 %v480
    %682 = vmatprep.subr.bf16.mxu0 %v483
    %683 = vmatpush1.bf16.msra.mxu0 %v482
    %684 = vmatprep.subr.bf16.mxu0 %v485
    %685 = vmatpush1.bf16.msra.mxu0 %v484
    %686 = vmatprep.subr.bf16.mxu0 %v487
    %687 = vmatpush1.bf16.msra.mxu0 %v486
    %688 = vmatprep.subr.bf16.mxu0 %v489
    %689 = vmatpush1.bf16.msra.mxu0 %v488
    %690 = vmatprep.subr.bf16.mxu0 %v491
    %691 = vmatpush1.bf16.msra.mxu0 %v490
    %692 = vmatprep.subr.bf16.mxu0 %v493
    %693 = vmatpush1.bf16.msra.mxu0 %v492
    %694 = vmatprep.subr.bf16.mxu0 %v495
    %695 = vmatpush1.bf16.msra.mxu0 %v494
    %696 = vmatprep.subr.bf16.mxu0 %v497
    %697 = vmatpush1.bf16.msra.mxu0 %v496
    %698 = vmatprep.subr.bf16.mxu0 %v499
    %699 = vmatpush1.bf16.msra.mxu0 %v498
    %700 = vmatprep.subr.bf16.mxu0 %v501
    %701 = vmatpush1.bf16.msra.mxu0 %v500
    %702 = vmatprep.subr.bf16.mxu0 %v503
    %703 = vmatpush1.bf16.msra.mxu0 %v502
    %704 = vmatprep.subr.bf16.mxu0 %v505
    %705 = vmatpush1.bf16.msra.mxu0 %v504
    %706 = vmatprep.mubr.bf16.mxu0 %v64
    %707 = vmatmul.mubr.bf16.gmra.mrb[0].mxu0 %v63
    %v708 = vpop.f32.mrb[0].mxu0
    %v709 = vadd.f32 %v173, %v708
    %v710 = vpop.f32.mrb[0].mxu0
    %v711 = vadd.f32 %v177, %v710
    %v712 = vpop.f32.mrb[0].mxu0
    %v713 = vpop.f32.mrb[0].mxu0
    %714 = vdwg.mxu0
    %715 = vmatprep.subr.bf16.mxu0 %v507
    %716 = vmatpush1.bf16.msra.mxu0 %v506
    %717 = vmatprep.subr.bf16.mxu0 %v509
    %718 = vmatpush1.bf16.msra.mxu0 %v508
    %719 = vmatprep.subr.bf16.mxu0 %v511
    %720 = vmatpush1.bf16.msra.mxu0 %v510
    %721 = vmatprep.subr.bf16.mxu0 %v513
    %722 = vmatpush1.bf16.msra.mxu0 %v512
    %723 = vmatprep.subr.bf16.mxu0 %v515
    %724 = vmatpush1.bf16.msra.mxu0 %v514
    %725 = vmatprep.subr.bf16.mxu0 %v517
    %726 = vmatpush1.bf16.msra.mxu0 %v516
    %727 = vmatprep.subr.bf16.mxu0 %v519
    %728 = vmatpush1.bf16.msra.mxu0 %v518
    %729 = vmatprep.subr.bf16.mxu0 %v521
    %730 = vmatpush1.bf16.msra.mxu0 %v520
    %731 = vmatprep.subr.bf16.mxu0 %v523
    %732 = vmatpush1.bf16.msra.mxu0 %v522
    %733 = vmatprep.subr.bf16.mxu0 %v525
    %734 = vmatpush1.bf16.msra.mxu0 %v524
    %735 = vmatprep.subr.bf16.mxu0 %v527
    %736 = vmatpush1.bf16.msra.mxu0 %v526
    %737 = vmatprep.subr.bf16.mxu0 %v529
    %738 = vmatpush1.bf16.msra.mxu0 %v528
    %739 = vmatprep.subr.bf16.mxu0 %v531
    %740 = vmatpush1.bf16.msra.mxu0 %v530
    %741 = vmatprep.subr.bf16.mxu0 %v533
    %742 = vmatpush1.bf16.msra.mxu0 %v532
    %743 = vmatprep.subr.bf16.mxu0 %v535
    %744 = vmatpush1.bf16.msra.mxu0 %v534
    %745 = vmatprep.subr.bf16.mxu0 %v537
    %746 = vmatpush1.bf16.msra.mxu0 %v536
    %747 = vmatprep.mubr.bf16.mxu0 %v66
    %748 = vmatmul.mubr.bf16.gmra.mrb[0].mxu0 %v65
    %v749 = vpop.f32.mrb[0].mxu0
    %v750 = vadd.f32 %v709, %v749
    %v751 = vpop.f32.mrb[0].mxu0
    %v752 = vadd.f32 %v711, %v751
    %v753 = vpop.f32.mrb[0].mxu0
    %v754 = vpop.f32.mrb[0].mxu0
    %755 = vdwg.mxu0
    %756 = vmatprep.subr.bf16.mxu0 %v539
    %757 = vmatpush1.bf16.msra.mxu0 %v538
    %758 = vmatprep.subr.bf16.mxu0 %v541
    %759 = vmatpush1.bf16.msra.mxu0 %v540
    %760 = vmatprep.subr.bf16.mxu0 %v543
    %761 = vmatpush1.bf16.msra.mxu0 %v542
    %762 = vmatprep.subr.bf16.mxu0 %v545
    %763 = vmatpush1.bf16.msra.mxu0 %v544
    %764 = vmatprep.subr.bf16.mxu0 %v547
    %765 = vmatpush1.bf16.msra.mxu0 %v546
    %766 = vmatprep.subr.bf16.mxu0 %v549
    %767 = vmatpush1.bf16.msra.mxu0 %v548
    %768 = vmatprep.subr.bf16.mxu0 %v551
    %769 = vmatpush1.bf16.msra.mxu0 %v550
    %770 = vmatprep.subr.bf16.mxu0 %v553
    %771 = vmatpush1.bf16.msra.mxu0 %v552
    %772 = vmatprep.subr.bf16.mxu0 %v555
    %773 = vmatpush1.bf16.msra.mxu0 %v554
    %774 = vmatprep.subr.bf16.mxu0 %v557
    %775 = vmatpush1.bf16.msra.mxu0 %v556
    %776 = vmatprep.subr.bf16.mxu0 %v559
    %777 = vmatpush1.bf16.msra.mxu0 %v558
    %778 = vmatprep.subr.bf16.mxu0 %v561
    %779 = vmatpush1.bf16.msra.mxu0 %v560
    %780 = vmatprep.subr.bf16.mxu0 %v563
    %781 = vmatpush1.bf16.msra.mxu0 %v562
    %782 = vmatprep.subr.bf16.mxu0 %v565
    %783 = vmatpush1.bf16.msra.mxu0 %v564
    %784 = vmatprep.subr.bf16.mxu0 %v567
    %785 = vmatpush1.bf16.msra.mxu0 %v566
    %786 = vmatprep.subr.bf16.mxu0 %v569
    %787 = vmatpush1.bf16.msra.mxu0 %v568
    %788 = vmatprep.mubr.bf16.mxu0 %v68
    %789 = vmatmul.mubr.bf16.gmra.mrb[0].mxu0 %v67
    %v790 = vpop.f32.mrb[0].mxu0
    %v791 = vadd.f32 %v750, %v790
    %v792 = vpop.f32.mrb[0].mxu0
    %v793 = vadd.f32 %v752, %v792
    %v794 = vpop.f32.mrb[0].mxu0
    %v795 = vpop.f32.mrb[0].mxu0
    %796 = vdwg.mxu0
    %797 = vmatprep.subr.bf16.mxu0 %v571
    %798 = vmatpush1.bf16.msra.mxu0 %v570
    %799 = vmatprep.subr.bf16.mxu0 0
    %800 = vmatpush1.bf16.msra.mxu0 0
    %801 = vmatprep.subr.bf16.mxu0 0
    %802 = vmatpush1.bf16.msra.mxu0 0
    %803 = vmatprep.subr.bf16.mxu0 0
    %804 = vmatpush1.bf16.msra.mxu0 0
    %805 = vmatprep.subr.bf16.mxu0 0
    %806 = vmatpush1.bf16.msra.mxu0 0
    %807 = vmatprep.subr.bf16.mxu0 0
    %808 = vmatpush1.bf16.msra.mxu0 0
    %809 = vmatprep.subr.bf16.mxu0 0
    %810 = vmatpush1.bf16.msra.mxu0 0
    %811 = vmatprep.subr.bf16.mxu0 0
    %812 = vmatpush1.bf16.msra.mxu0 0
    %813 = vmatprep.subr.bf16.mxu0 0
    %814 = vmatpush1.bf16.msra.mxu0 0
    %815 = vmatprep.subr.bf16.mxu0 0
    %816 = vmatpush1.bf16.msra.mxu0 0
    %817 = vmatprep.subr.bf16.mxu0 0
    %818 = vmatpush1.bf16.msra.mxu0 0
    %819 = vmatprep.subr.bf16.mxu0 0
    %820 = vmatpush1.bf16.msra.mxu0 0
    %821 = vmatprep.subr.bf16.mxu0 0
    %822 = vmatpush1.bf16.msra.mxu0 0
    %823 = vmatprep.subr.bf16.mxu0 0
    %824 = vmatpush1.bf16.msra.mxu0 0
    %825 = vmatprep.subr.bf16.mxu0 0
    %826 = vmatpush1.bf16.msra.mxu0 0
    %827 = vmatprep.subr.bf16.mxu0 0
    %828 = vmatpush1.bf16.msra.mxu0 0
    %829 = vmatprep.mubr.bf16.mxu0 0
    %830 = vmatmul.mubr.bf16.gmra.mrb[0].mxu0 %v672
    %v831 = vpop.f32.mrb[0].mxu0
    %v832 = vadd.f32 %v791, %v831
    %v833 = vpop.f32.mrb[0].mxu0
    %v834 = vadd.f32 %v793, %v833
    %v835 = vpop.f32.mrb[0].mxu0
    %v836 = vpop.f32.mrb[0].mxu0
    %837 = vdwg.mxu0
    %v838 = vmax.f32 %v832, 0.0
    %v839 = vmax.f32 %v834, 0.0
    %v840 = vpack.c.bf16 %v838, %v838
    %v841 = vpack.c.bf16 %v839, %v839
    %v842 = vld [vmem:[#allocation2] sm:$0xff]
    %v843 = vld [vmem:[#allocation2 + $0x8] sm:$0xff]
    %v844 = vld [vmem:[#allocation2 + $0x10] sm:$0xff]
    %v845 = vld [vmem:[#allocation2 + $0x18] sm:$0xff]
    %v846 = vld [vmem:[#allocation2 + $0x20] sm:$0xff]
    %v847 = vld [vmem:[#allocation2 + $0x28] sm:$0xff]
    %v848 = vld [vmem:[#allocation2 + $0x30] sm:$0xff]
    %v849 = vld [vmem:[#allocation2 + $0x38] sm:$0xff]
    %v850 = vld [vmem:[#allocation2 + $0x40] sm:$0xff]
    %v851 = vld [vmem:[#allocation2 + $0x48] sm:$0xff]
    %v852 = vld [vmem:[#allocation2 + $0x50] sm:$0xff]
    %v853 = vld [vmem:[#allocation2 + $0x58] sm:$0xff]
    %v854 = vld [vmem:[#allocation2 + $0x60] sm:$0xff]
    %v855 = vld [vmem:[#allocation2 + $0x68] sm:$0xff]
    %v856 = vld [vmem:[#allocation2 + $0x70] sm:$0xff]
    %v857 = vld [vmem:[#allocation2 + $0x78] sm:$0xff]
    %v858 = vld [vmem:[#allocation2 + $0x80] sm:$0xff]
    %v859 = vld [vmem:[#allocation2 + $0x88] sm:$0xff]
    %v860 = vld [vmem:[#allocation2 + $0x90] sm:$0xff]
    %v861 = vld [vmem:[#allocation2 + $0x98] sm:$0xff]
    %v862 = vld [vmem:[#allocation2 + $0xa0] sm:$0xff]
    %v863 = vld [vmem:[#allocation2 + $0xa8] sm:$0xff]
    %v864 = vld [vmem:[#allocation2 + $0xb0] sm:$0xff]
    %v865 = vld [vmem:[#allocation2 + $0xb8] sm:$0xff]
    %v866 = vld [vmem:[#allocation2 + $0xc0] sm:$0xff]
    %v867 = vld [vmem:[#allocation2 + $0xc8] sm:$0xff]
    %v868 = vld [vmem:[#allocation2 + $0xd0] sm:$0xff]
    %v869 = vld [vmem:[#allocation2 + $0xd8] sm:$0xff]
    %v870 = vld [vmem:[#allocation2 + $0xe0] sm:$0xff]
    %v871 = vld [vmem:[#allocation2 + $0xe8] sm:$0xff]
    %v872 = vld [vmem:[#allocation2 + $0xf0] sm:$0xff]
    %v873 = vld [vmem:[#allocation2 + $0xf8] sm:$0xff]
    %v874 = vld [vmem:[%s4] sm:$0x3]
    %v876 = vlaneseq
    %v877 = vshrl.u32 %v876, 7
    %v878 = vsub.s32 0, %v877
    %v879 = vrot.slane %v874, %v878
    %v880 = vlaneseq
    %v881 = vshrl.u32 %v880, 7
    %v882 = vsub.s32 1, %v881
    %v883 = vrot.slane %v874, %v882
    %v918 = vunpack.c.l.b16 %v842
    %v919 = vunpack.c.h.b16 %v842
    %v920 = vunpack.c.l.b16 %v843
    %v921 = vunpack.c.h.b16 %v843
    %v922 = vunpack.c.l.b16 %v844
    %v923 = vunpack.c.h.b16 %v844
    %v924 = vunpack.c.l.b16 %v845
    %v925 = vunpack.c.h.b16 %v845
    %v926 = vunpack.c.l.b16 %v846
    %v927 = vunpack.c.h.b16 %v846
    %v928 = vunpack.c.l.b16 %v847
    %v929 = vunpack.c.h.b16 %v847
    %v930 = vunpack.c.l.b16 %v848
    %v931 = vunpack.c.h.b16 %v848
    %v932 = vunpack.c.l.b16 %v849
    %v933 = vunpack.c.h.b16 %v849
    %v934 = vunpack.c.l.b16 %v850
    %v935 = vunpack.c.h.b16 %v850
    %v936 = vunpack.c.l.b16 %v851
    %v937 = vunpack.c.h.b16 %v851
    %v938 = vunpack.c.l.b16 %v852
    %v939 = vunpack.c.h.b16 %v852
    %v940 = vunpack.c.l.b16 %v853
    %v941 = vunpack.c.h.b16 %v853
    %v942 = vunpack.c.l.b16 %v854
    %v943 = vunpack.c.h.b16 %v854
    %v944 = vunpack.c.l.b16 %v855
    %v945 = vunpack.c.h.b16 %v855
    %v946 = vunpack.c.l.b16 %v856
    %v947 = vunpack.c.h.b16 %v856
    %v948 = vunpack.c.l.b16 %v857
    %v949 = vunpack.c.h.b16 %v857
    %v950 = vunpack.c.l.b16 %v858
    %v951 = vunpack.c.h.b16 %v858
    %v952 = vunpack.c.l.b16 %v859
    %v953 = vunpack.c.h.b16 %v859
    %v954 = vunpack.c.l.b16 %v860
    %v955 = vunpack.c.h.b16 %v860
    %v956 = vunpack.c.l.b16 %v861
    %v957 = vunpack.c.h.b16 %v861
    %v958 = vunpack.c.l.b16 %v862
    %v959 = vunpack.c.h.b16 %v862
    %v960 = vunpack.c.l.b16 %v863
    %v961 = vunpack.c.h.b16 %v863
    %v962 = vunpack.c.l.b16 %v864
    %v963 = vunpack.c.h.b16 %v864
    %v964 = vunpack.c.l.b16 %v865
    %v965 = vunpack.c.h.b16 %v865
    %v966 = vunpack.c.l.b16 %v866
    %v967 = vunpack.c.h.b16 %v866
    %v968 = vunpack.c.l.b16 %v867
    %v969 = vunpack.c.h.b16 %v867
    %v970 = vunpack.c.l.b16 %v868
    %v971 = vunpack.c.h.b16 %v868
    %v972 = vunpack.c.l.b16 %v869
    %v973 = vunpack.c.h.b16 %v869
    %v974 = vunpack.c.l.b16 %v870
    %v975 = vunpack.c.h.b16 %v870
    %v976 = vunpack.c.l.b16 %v871
    %v977 = vunpack.c.h.b16 %v871
    %v978 = vunpack.c.l.b16 %v872
    %v979 = vunpack.c.h.b16 %v872
    %v980 = vunpack.c.l.b16 %v873
    %v981 = vunpack.c.h.b16 %v873
    %v982 = vpack.c.b16 %v920, %v918
    %v983 = vpack.c.b16 %v921, %v919
    %v984 = vpack.c.b16 %v924, %v922
    %v985 = vpack.c.b16 %v925, %v923
    %v986 = vpack.c.b16 %v928, %v926
    %v987 = vpack.c.b16 %v929, %v927
    %v988 = vpack.c.b16 %v932, %v930
    %v989 = vpack.c.b16 %v933, %v931
    %v990 = vpack.c.b16 %v936, %v934
    %v991 = vpack.c.b16 %v937, %v935
    %v992 = vpack.c.b16 %v940, %v938
    %v993 = vpack.c.b16 %v941, %v939
    %v994 = vpack.c.b16 %v944, %v942
    %v995 = vpack.c.b16 %v945, %v943
    %v996 = vpack.c.b16 %v948, %v946
    %v997 = vpack.c.b16 %v949, %v947
    %v998 = vpack.c.b16 %v952, %v950
    %v999 = vpack.c.b16 %v953, %v951
    %v1000 = vpack.c.b16 %v956, %v954
    %v1001 = vpack.c.b16 %v957, %v955
    %v1002 = vpack.c.b16 %v960, %v958
    %v1003 = vpack.c.b16 %v961, %v959
    %v1004 = vpack.c.b16 %v964, %v962
    %v1005 = vpack.c.b16 %v965, %v963
    %v1006 = vpack.c.b16 %v968, %v966
    %v1007 = vpack.c.b16 %v969, %v967
    %v1008 = vpack.c.b16 %v972, %v970
    %v1009 = vpack.c.b16 %v973, %v971
    %v1010 = vpack.c.b16 %v976, %v974
    %v1011 = vpack.c.b16 %v977, %v975
    %v1012 = vpack.c.b16 %v980, %v978
    %v1013 = vpack.c.b16 %v981, %v979
    %1046 = vmatprep.subr.bf16.mxu0 %v983
    %1047 = vmatpush1.bf16.msra.mxu0 %v982
    %1048 = vmatprep.subr.bf16.mxu0 %v985
    %1049 = vmatpush1.bf16.msra.mxu0 %v984
    %1050 = vmatprep.subr.bf16.mxu0 %v987
    %1051 = vmatpush1.bf16.msra.mxu0 %v986
    %1052 = vmatprep.subr.bf16.mxu0 %v989
    %1053 = vmatpush1.bf16.msra.mxu0 %v988
    %1054 = vmatprep.subr.bf16.mxu0 %v991
    %1055 = vmatpush1.bf16.msra.mxu0 %v990
    %1056 = vmatprep.subr.bf16.mxu0 %v993
    %1057 = vmatpush1.bf16.msra.mxu0 %v992
    %1058 = vmatprep.subr.bf16.mxu0 %v995
    %1059 = vmatpush1.bf16.msra.mxu0 %v994
    %1060 = vmatprep.subr.bf16.mxu0 %v997
    %1061 = vmatpush1.bf16.msra.mxu0 %v996
    %1062 = vmatprep.subr.bf16.mxu0 %v999
    %1063 = vmatpush1.bf16.msra.mxu0 %v998
    %1064 = vmatprep.subr.bf16.mxu0 %v1001
    %1065 = vmatpush1.bf16.msra.mxu0 %v1000
    %1066 = vmatprep.subr.bf16.mxu0 %v1003
    %1067 = vmatpush1.bf16.msra.mxu0 %v1002
    %1068 = vmatprep.subr.bf16.mxu0 %v1005
    %1069 = vmatpush1.bf16.msra.mxu0 %v1004
    %1070 = vmatprep.subr.bf16.mxu0 %v1007
    %1071 = vmatpush1.bf16.msra.mxu0 %v1006
    %1072 = vmatprep.subr.bf16.mxu0 %v1009
    %1073 = vmatpush1.bf16.msra.mxu0 %v1008
    %1074 = vmatprep.subr.bf16.mxu0 %v1011
    %1075 = vmatpush1.bf16.msra.mxu0 %v1010
    %1076 = vmatprep.subr.bf16.mxu0 %v1013
    %1077 = vmatpush1.bf16.msra.mxu0 %v1012
    %1078 = vmatprep.mubr.bf16.mxu0 %v841
    %1079 = vmatmul.mubr.bf16.gmra.mrb[0].mxu0 %v840
    %v1080 = vpop.f32.mrb[0].mxu0
    %v1081 = vadd.f32 %v879, %v1080
    %v1082 = vpop.f32.mrb[0].mxu0
    %v1083 = vadd.f32 %v883, %v1082
    %v1084 = vpop.f32.mrb[0].mxu0
    %v1085 = vpop.f32.mrb[0].mxu0
    %1086 = vdwg.mxu0
    %v1087 = vmax.f32 %v1081, 0.0
    %v1088 = vmax.f32 %v1083, 0.0
    %v1089 = vpack.c.bf16 %v1087, %v1087
    %v1090 = vpack.c.bf16 %v1088, %v1088
    %v1091 = vld [vmem:[#allocation5] sm:$0xf]
    %v1092 = vld [vmem:[#allocation5 + $0x4] sm:$0xf]
    %v1093 = vld [vmem:[#allocation5 + $0x8] sm:$0xf]
    %v1094 = vld [vmem:[#allocation5 + $0xc] sm:$0xf]
    %v1095 = vld [vmem:[#allocation5 + $0x10] sm:$0xf]
    %v1096 = vld [vmem:[#allocation5 + $0x14] sm:$0xf]
    %v1097 = vld [vmem:[#allocation5 + $0x18] sm:$0xf]
    %v1098 = vld [vmem:[#allocation5 + $0x1c] sm:$0xf]
    %v1099 = vld [vmem:[#allocation5 + $0x20] sm:$0xf]
    %v1100 = vld [vmem:[#allocation5 + $0x24] sm:$0xf]
    %v1101 = vld [vmem:[#allocation5 + $0x28] sm:$0xf]
    %v1102 = vld [vmem:[#allocation5 + $0x2c] sm:$0xf]
    %v1103 = vld [vmem:[#allocation5 + $0x30] sm:$0xf]
    %v1104 = vld [vmem:[#allocation5 + $0x34] sm:$0xf]
    %v1105 = vld [vmem:[#allocation5 + $0x38] sm:$0xf]
    %v1106 = vld [vmem:[#allocation5 + $0x3c] sm:$0xf]
    %v1107 = vld [vmem:[#allocation5 + $0x40] sm:$0xf]
    %v1108 = vld [vmem:[#allocation5 + $0x44] sm:$0xf]
    %v1109 = vld [vmem:[#allocation5 + $0x48] sm:$0xf]
    %v1110 = vld [vmem:[#allocation5 + $0x4c] sm:$0xf]
    %v1111 = vld [vmem:[#allocation5 + $0x50] sm:$0xf]
    %v1112 = vld [vmem:[#allocation5 + $0x54] sm:$0xf]
    %v1113 = vld [vmem:[#allocation5 + $0x58] sm:$0xf]
    %v1114 = vld [vmem:[#allocation5 + $0x5c] sm:$0xf]
    %v1115 = vld [vmem:[#allocation5 + $0x60] sm:$0xf]
    %v1116 = vld [vmem:[#allocation5 + $0x64] sm:$0xf]
    %v1117 = vld [vmem:[#allocation5 + $0x68] sm:$0xf]
    %v1118 = vld [vmem:[#allocation5 + $0x6c] sm:$0xf]
    %v1119 = vld [vmem:[#allocation5 + $0x70] sm:$0xf]
    %v1120 = vld [vmem:[#allocation5 + $0x74] sm:$0xf]
    %v1121 = vld [vmem:[#allocation5 + $0x78] sm:$0xf]
    %v1122 = vld [vmem:[#allocation5 + $0x7c] sm:$0xf]
    %v1123 = vld [vmem:[%s6] sm:$0x1]
    %v1125 = vlaneseq
    %v1126 = vshrl.u32 %v1125, 7
    %v1127 = vsub.s32 0, %v1126
    %v1128 = vrot.slane %v1123, %v1127
    %v1162 = vunpack.c.l.b16 %v1091
    %v1163 = vunpack.c.l.b16 %v1092
    %v1164 = vunpack.c.l.b16 %v1093
    %v1165 = vunpack.c.l.b16 %v1094
    %v1166 = vunpack.c.l.b16 %v1095
    %v1167 = vunpack.c.l.b16 %v1096
    %v1168 = vunpack.c.l.b16 %v1097
    %v1169 = vunpack.c.l.b16 %v1098
    %v1170 = vunpack.c.l.b16 %v1099
    %v1171 = vunpack.c.l.b16 %v1100
    %v1172 = vunpack.c.l.b16 %v1101
    %v1173 = vunpack.c.l.b16 %v1102
    %v1174 = vunpack.c.l.b16 %v1103
    %v1175 = vunpack.c.l.b16 %v1104
    %v1176 = vunpack.c.l.b16 %v1105
    %v1177 = vunpack.c.l.b16 %v1106
    %v1178 = vunpack.c.l.b16 %v1107
    %v1179 = vunpack.c.l.b16 %v1108
    %v1180 = vunpack.c.l.b16 %v1109
    %v1181 = vunpack.c.l.b16 %v1110
    %v1182 = vunpack.c.l.b16 %v1111
    %v1183 = vunpack.c.l.b16 %v1112
    %v1184 = vunpack.c.l.b16 %v1113
    %v1185 = vunpack.c.l.b16 %v1114
    %v1186 = vunpack.c.l.b16 %v1115
    %v1187 = vunpack.c.l.b16 %v1116
    %v1188 = vunpack.c.l.b16 %v1117
    %v1189 = vunpack.c.l.b16 %v1118
    %v1190 = vunpack.c.l.b16 %v1119
    %v1191 = vunpack.c.l.b16 %v1120
    %v1192 = vunpack.c.l.b16 %v1121
    %v1193 = vunpack.c.l.b16 %v1122
    %v1194 = vpack.c.b16 %v1163, %v1162
    %v1195 = vpack.c.b16 %v1165, %v1164
    %v1196 = vpack.c.b16 %v1167, %v1166
    %v1197 = vpack.c.b16 %v1169, %v1168
    %v1198 = vpack.c.b16 %v1171, %v1170
    %v1199 = vpack.c.b16 %v1173, %v1172
    %v1200 = vpack.c.b16 %v1175, %v1174
    %v1201 = vpack.c.b16 %v1177, %v1176
    %v1202 = vpack.c.b16 %v1179, %v1178
    %v1203 = vpack.c.b16 %v1181, %v1180
    %v1204 = vpack.c.b16 %v1183, %v1182
    %v1205 = vpack.c.b16 %v1185, %v1184
    %v1206 = vpack.c.b16 %v1187, %v1186
    %v1207 = vpack.c.b16 %v1189, %v1188
    %v1208 = vpack.c.b16 %v1191, %v1190
    %v1209 = vpack.c.b16 %v1193, %v1192
    %1226 = vmatprep.subr.bf16.mxu0 0
    %1227 = vmatpush1.bf16.msra.mxu0 %v1194
    %1228 = vmatprep.subr.bf16.mxu0 0
    %1229 = vmatpush1.bf16.msra.mxu0 %v1195
    %1230 = vmatprep.subr.bf16.mxu0 0
    %1231 = vmatpush1.bf16.msra.mxu0 %v1196
    %1232 = vmatprep.subr.bf16.mxu0 0
    %1233 = vmatpush1.bf16.msra.mxu0 %v1197
    %1234 = vmatprep.subr.bf16.mxu0 0
    %1235 = vmatpush1.bf16.msra.mxu0 %v1198
    %1236 = vmatprep.subr.bf16.mxu0 0
    %1237 = vmatpush1.bf16.msra.mxu0 %v1199
    %1238 = vmatprep.subr.bf16.mxu0 0
    %1239 = vmatpush1.bf16.msra.mxu0 %v1200
    %1240 = vmatprep.subr.bf16.mxu0 0
    %1241 = vmatpush1.bf16.msra.mxu0 %v1201
    %1242 = vmatprep.subr.bf16.mxu0 0
    %1243 = vmatpush1.bf16.msra.mxu0 %v1202
    %1244 = vmatprep.subr.bf16.mxu0 0
    %1245 = vmatpush1.bf16.msra.mxu0 %v1203
    %1246 = vmatprep.subr.bf16.mxu0 0
    %1247 = vmatpush1.bf16.msra.mxu0 %v1204
    %1248 = vmatprep.subr.bf16.mxu0 0
    %1249 = vmatpush1.bf16.msra.mxu0 %v1205
    %1250 = vmatprep.subr.bf16.mxu0 0
    %1251 = vmatpush1.bf16.msra.mxu0 %v1206
    %1252 = vmatprep.subr.bf16.mxu0 0
    %1253 = vmatpush1.bf16.msra.mxu0 %v1207
    %1254 = vmatprep.subr.bf16.mxu0 0
    %1255 = vmatpush1.bf16.msra.mxu0 %v1208
    %1256 = vmatprep.subr.bf16.mxu0 0
    %1257 = vmatpush1.bf16.msra.mxu0 %v1209
    %1258 = vmatprep.mubr.bf16.mxu0 %v1090
    %1259 = vmatmul.mubr.bf16.gmra.mrb[0].mxu0 %v1089
    %v1260 = vpop.f32.mrb[0].mxu0
    %v1261 = vadd.f32 %v1128, %v1260
    %v1262 = vpop.f32.mrb[0].mxu0
    %v1263 = vpop.f32.mrb[0].mxu0
    %v1264 = vpop.f32.mrb[0].mxu0
    %1265 = vdwg.mxu0
    %1266 = vst [vmem:[#allocation7] sm:$0xff] %v1261
    // Predicated region
    $region38: #{mlp_forward.1} parent=1 // pred_check
      _
    $region39: #{mlp_forward.1} parent=1 // pred_check_branch
      %1268 = sbr.rel (0) target = $region41
    $region40: #{mlp_forward.1} parent=1 // pred_region
      %s1270 = ssub.s32 128, 128
      %1271 = vsyncadd [#allocation4], %s1270
      %s1273 = sshll.u32 [#allocation7], 4
      %s1274 = int_to_ptr.vmem [resolvable:$true] %s1273
      %1276 = dma.vmem_to_hbm [thread:$0]  %s1274, 128, %s7, [#allocation4]
    $region41: #{mlp_forward.1} parent=1 // pred_fallthru
      _
    // Predicated region
    $region42: #{mlp_forward.1} parent=1 // pred_check
      _
    $region43: #{mlp_forward.1} parent=1 // pred_check_branch
      %1278 = sbr.rel (0) target = $region45
    $region44: #{mlp_forward.1} parent=1 // pred_region
      %1279 = dma.done [#allocation4], 128
    $region45: #{mlp_forward.1} parent=1 // pred_fallthru
      _
    %1280 = vsyncpa [#allocation3], 1
    %1281 = vsyncpa [#allocation6], 1
    %1282 = vsyncpa [#allocation4], 1

</llo_original>
